<compile_context>
chip_gen: v7x
topology: tpu7x:2x2x1
jax: 0.10.0
libtpu: 0.0.40
codegen_flags: <defaults>
</compile_context>

<pallas_src>
import math
from functools import partial

import jax
import jax.numpy as jnp
from jax.experimental import pallas as pl
from jax.experimental.pallas import tpu as pltpu

KERNEL_SIZE = 10
STRIDE = 2
PADDING = 5
LN_EPS = 1e-5

_KH = KERNEL_SIZE // STRIDE       # taps per polyphase branch (5)
_HALO = 8                         # sublane-aligned halo rows (only _KH-1 = 4 needed)
_SQRT_2_OVER_PI = 0.7978845608028654


def _round_up(x, m):
    return ((x + m - 1) // m) * m


def _cdiv(a, b):
    return -(-a // b)


def _vmem_limit_bytes():
    """Scoped-VMEM limit: ~3/4 of physical VMEM, capped at 100 MiB.

    v5e/v6e have 128 MiB physical (default scoped limit underuses it); v7x has
    only 64 MiB/TC, so we must not request more than it can grant.
    """
    cap = None
    try:
        cap = getattr(pltpu.get_tpu_info(), "vmem_capacity_bytes", None)
    except Exception:
        cap = None
    if not cap:
        cap = 64 * 1024 * 1024
    return int(min(100 * 1024 * 1024, cap * 3 // 4))


def _make_kernel(tile_rows):
    TT = tile_rows

    def kernel(x_ref, w_ref, b_ref, g_ref, beta_ref, o_ref):
        # x_ref   : (TT + _HALO, 2*Cin) bf16  merged-polyphase input window
        # w_ref   : (_KH, 2*Cin, Cout)  bf16  per-tap matmul weights
        # b/g/beta: (1, Cout)           f32
        # o_ref   : (TT, Cout)          f32
        acc = jnp.dot(x_ref[0:TT, :], w_ref[0],
                      preferred_element_type=jnp.float32)
        for a in range(1, _KH):
            acc = acc + jnp.dot(x_ref[a:a + TT, :], w_ref[a],
                                preferred_element_type=jnp.float32)
        acc = acc + b_ref[...]

        # One-pass LayerNorm over channels: var = E[x^2] - mean^2 (single
        # stream over the f32 accumulator; max(.,0) guards padded zero rows).
        inv_c = jnp.float32(1.0 / acc.shape[-1])
        mean = jnp.sum(acc, axis=-1, keepdims=True) * inv_c
        msq = jnp.sum(acc * acc, axis=-1, keepdims=True) * inv_c
        var = jnp.maximum(msq - mean * mean, 0.0)
        y = (acc - mean) * jax.lax.rsqrt(var + LN_EPS)
        y = y * g_ref[...] + beta_ref[...]

        # tanh-approximate GELU: tanh runs on the EUP slot, keeping the VALU
        # free for the LN arithmetic (vs a long erf polynomial).
        y = 0.5 * y * (1.0 + jnp.tanh(_SQRT_2_OVER_PI * (y + 0.044715 * y * y * y)))

        o_ref[...] = y.astype(o_ref.dtype)

    return kernel


def input_conv1d_forward(x, conv_w, conv_b, ln_gamma, ln_beta, *, tile_rows=1024):
    """x: (N, C_in, L).  Returns (N, L_out, C_out) float32 (eval mode)."""
    N, C_in, L = x.shape
    C_out = conv_w.shape[0]
    C2 = 2 * C_in

    L_out = (L + 2 * PADDING - KERNEL_SIZE) // STRIDE + 1
    Lseg = _round_up(L + 2 * PADDING, 2)   # per-batch padded length (even)
    Lh = Lseg // 2                         # merged-polyphase rows per batch
    M = N * Lh                             # output rows carried (>= N * L_out)

    # Halo / segment-tail invariants: every *valid* output row only reads
    # merged rows of its own batch segment, and the lookahead fits the packed
    # 8-row halo.  Holds for (K=10, s=2, p=5); assert so constant changes
    # can't silently read cross-batch data.
    assert _KH - 1 <= _HALO
    assert L_out + _KH - 1 <= Lh, (L_out, Lh)

    vmem_limit = _vmem_limit_bytes()

    # Tile-row budget: 2x bf16 input window + 2x f32 output (double buffers)
    # + f32 epilogue temporaries + double-buffered weights must fit well inside
    # the scoped limit (critical on v7x's 64 MiB/TC).
    fixed = 2 * (_KH * C2 * C_out * 2) + 6 * C_out * 4
    per_row = 2 * C2 * 2 + 2 * C_out * 4 + 3 * C_out * 4
    budget = int(vmem_limit * 0.6)
    tt_cap = max(8, ((budget - fixed) // per_row) // 8 * 8)
    TT = max(8, min(_round_up(tile_rows, 8), _round_up(M, 8), tt_cap))
    n_tiles = _cdiv(M, TT)
    if n_tiles > 1 and n_tiles % 2 == 1:
        # Prefer an even tile count so v7x's two TensorCores stay balanced on
        # the "parallel" grid axis.
        TT = max(8, _round_up(_cdiv(M, n_tiles + 1), 8))
        n_tiles = _cdiv(M, TT)
    M_pad = n_tiles * TT

    # ---------- glue: one pad pass + free polyphase reshape + halo pack ----------
    x_cl = jnp.transpose(x, (0, 2, 1)).astype(jnp.float32)              # (N, L, Cin)
    x_cl = jnp.pad(x_cl, ((0, 0), (PADDING, Lseg - L - PADDING), (0, 0)))
    # Row-major reshape merges the even/odd polyphase branches into one operand:
    # row m = [x_pad[2m, :], x_pad[2m+1, :]]  ->  contraction depth 2*Cin.
    xm = x_cl.reshape(N * Lh, C2).astype(jnp.bfloat16)

    pad_rows = (n_tiles + 1) * TT - M
    xm = jnp.pad(xm, ((0, pad_rows), (0, 0)))
    main = xm[: n_tiles * TT].reshape(n_tiles, TT, C2)
    halo = xm[TT:(n_tiles + 1) * TT].reshape(n_tiles, TT, C2)[:, :_HALO, :]
    x_t = jnp.concatenate([main, halo], axis=1)                         # (nt, TT+8, 2Cin)

    # Conv weight (Cout, Cin, K) -> merged per-tap weights (KH, 2*Cin, Cout):
    # Wcat[a] = [W[:, :, 2a].T ; W[:, :, 2a+1].T]  (a single transpose+reshape).
    w_t = jnp.transpose(conv_w, (2, 1, 0)).astype(jnp.bfloat16)         # (K, Cin, Cout)
    wcat = w_t.reshape(_KH, C2, C_out)
    b_row = conv_b.reshape(1, C_out).astype(jnp.float32)
    g_row = ln_gamma.reshape(1, C_out).astype(jnp.float32)
    beta_row = ln_beta.reshape(1, C_out).astype(jnp.float32)

    flops = 2 * M_pad * (KERNEL_SIZE * C_in) * C_out
    bytes_accessed = (2 * (x_t.size + wcat.size)                        # bf16 inputs
                      + 4 * (b_row.size + g_row.size + beta_row.size)
                      + 4 * M_pad * C_out)                              # f32 output
    cost = pl.CostEstimate(flops=flops, transcendentals=M_pad * C_out,
                           bytes_accessed=bytes_accessed)

    win = TT + _HALO
    out = pl.pallas_call(
        _make_kernel(TT),
        out_shape=jax.ShapeDtypeStruct((M_pad, C_out), jnp.float32),
        grid=(n_tiles,),
        in_specs=[
            pl.BlockSpec((None, win, C2), lambda j: (j, 0, 0)),         # input window
            pl.BlockSpec((_KH, C2, C_out), lambda j: (0, 0, 0)),        # merged weights
            pl.BlockSpec((1, C_out), lambda j: (0, 0)),                 # conv bias
            pl.BlockSpec((1, C_out), lambda j: (0, 0)),                 # LN gamma
            pl.BlockSpec((1, C_out), lambda j: (0, 0)),                 # LN beta
        ],
        out_specs=pl.BlockSpec((TT, C_out), lambda j: (j, 0)),
        compiler_params=pltpu.CompilerParams(
            dimension_semantics=("parallel",),
            vmem_limit_bytes=vmem_limit,
        ),
        cost_estimate=cost,
    )(x_t, wcat, b_row, g_row, beta_row)

    # Drop tile padding and per-batch over-computed tail rows.
    return out[:M].reshape(N, Lh, C_out)[:, :L_out, :]


def _reference_forward(x, conv_w, conv_b, ln_gamma, ln_beta):
    """Pure-JAX f32 reference mirroring the PyTorch forward (eval mode)."""
    y = jax.lax.conv_general_dilated(
        x, conv_w,
        window_strides=(STRIDE,),
        padding=[(PADDING, PADDING)],
        dimension_numbers=("NCH", "OIH", "NCH"),
    )
    y = y + conv_b[None, :, None]
    y = jnp.transpose(y, (0, 2, 1))  # (N, L_out, C)
    mean = jnp.mean(y, axis=-1, keepdims=True)
    var = jnp.mean((y - mean) ** 2, axis=-1, keepdims=True)
    y = (y - mean) / jnp.sqrt(var + LN_EPS)
    y = y * ln_gamma + ln_beta
    return jax.nn.gelu(y, approximate=False)


if __name__ == "__main__":
    # Small shapes consistent with the module: x is (batch, num_features, length).
    # L=64 with tile_rows=32 exercises multiple grid tiles, the halo path and a
    # batch boundary falling inside a tile.
    N, C, L = 2, 16, 64
    key = jax.random.PRNGKey(0)
    k_x, k_w, k_b = jax.random.split(key, 3)

    x = jax.random.normal(k_x, (N, C, L), dtype=jnp.float32)

    # Deterministic synthetic parameters (PyTorch-like init scale).
    fan_in = C * KERNEL_SIZE
    bound = 1.0 / math.sqrt(fan_in)
    conv_w = jax.random.uniform(k_w, (C, C, KERNEL_SIZE), jnp.float32, -bound, bound)
    conv_b = jax.random.uniform(k_b, (C,), jnp.float32, -bound, bound)
    ln_gamma = jnp.ones((C,), jnp.float32)   # nn.LayerNorm default init
    ln_beta = jnp.zeros((C,), jnp.float32)

    fwd = jax.jit(partial(input_conv1d_forward, tile_rows=32))
    out = jax.block_until_ready(fwd(x, conv_w, conv_b, ln_gamma, ln_beta))

    ref = _reference_forward(x, conv_w, conv_b, ln_gamma, ln_beta)
    assert out.shape == ref.shape, (out.shape, ref.shape)
    max_err = float(jnp.max(jnp.abs(out - ref)))
    # Tolerance covers bf16 matmul operands + tanh-approx GELU vs the exact-erf
    # f32 reference (outputs are O(1) after LayerNorm).
    assert max_err < 3e-2, f"mismatch vs reference: {max_err}"

    print("KERNEL_OK")
</pallas_src>

<mosaic_0001>
module attributes {stable_mosaic.version = 11 : i64} {
  func.func @kernel(%arg0: i32, %arg1: memref<1x32x32xbf16, #tpu.memory_space<vmem>>, %arg2: memref<5x32x16xbf16, #tpu.memory_space<vmem>>, %arg3: memref<1x16xf32, #tpu.memory_space<vmem>>, %arg4: memref<1x16xf32, #tpu.memory_space<vmem>>, %arg5: memref<1x16xf32, #tpu.memory_space<vmem>>, %arg6: memref<24x16xf32, #tpu.memory_space<vmem>>) attributes {dimension_semantics = [#tpu.dimension_semantics<parallel>], iteration_bounds = array<i64: 4>, scalar_prefetch = 0 : i64, scratch_operands = 0 : i64, tpu.core_type = #tpu.core_type<tc>, window_params = [{transform_indices = @transform_0, window_bounds = array<i64: 1, 32, 32>}, {pipeline_mode = #tpu.pipeline_mode<synchronous>, transform_indices = @transform_1, window_bounds = array<i64: 5, 32, 16>}, {pipeline_mode = #tpu.pipeline_mode<synchronous>, transform_indices = @transform_2, window_bounds = array<i64: 1, 16>}, {pipeline_mode = #tpu.pipeline_mode<synchronous>, transform_indices = @transform_3, window_bounds = array<i64: 1, 16>}, {pipeline_mode = #tpu.pipeline_mode<synchronous>, transform_indices = @transform_4, window_bounds = array<i64: 1, 16>}, {transform_indices = @transform_5, window_bounds = array<i64: 24, 16>}]} {
    %c0 = arith.constant 0 : index
    %c0_0 = arith.constant 0 : index
    %c0_1 = arith.constant 0 : index
    %0 = vector.load %arg1[%c0, %c0_0, %c0_1] : memref<1x32x32xbf16, #tpu.memory_space<vmem>>, vector<1x24x32xbf16>
    %1 = vector.shape_cast %0 : vector<1x24x32xbf16> to vector<24x32xbf16>
    %c0_2 = arith.constant 0 : index
    %c0_3 = arith.constant 0 : index
    %c0_4 = arith.constant 0 : index
    %2 = vector.load %arg2[%c0_2, %c0_3, %c0_4] : memref<5x32x16xbf16, #tpu.memory_space<vmem>>, vector<1x32x16xbf16>
    %3 = vector.shape_cast %2 : vector<1x32x16xbf16> to vector<32x16xbf16>
    %cst = arith.constant dense<0.000000e+00> : vector<24x16xf32>
    %4 = tpu.matmul %1, %3, %cst {dimension_numbers = #tpu.dot_dimension_numbers<[1], [0], [0], [1], [0, 0, 1, 1], [], []>} : vector<24x32xbf16>, vector<32x16xbf16>, vector<24x16xf32> -> vector<24x16xf32>
    %c0_5 = arith.constant 0 : index
    %c1 = arith.constant 1 : index
    %c0_6 = arith.constant 0 : index
    %5 = vector.load %arg1[%c0_5, %c1, %c0_6] : memref<1x32x32xbf16, #tpu.memory_space<vmem>>, vector<1x24x32xbf16>
    %6 = vector.shape_cast %5 : vector<1x24x32xbf16> to vector<24x32xbf16>
    %c1_7 = arith.constant 1 : index
    %c0_8 = arith.constant 0 : index
    %c0_9 = arith.constant 0 : index
    %7 = vector.load %arg2[%c1_7, %c0_8, %c0_9] : memref<5x32x16xbf16, #tpu.memory_space<vmem>>, vector<1x32x16xbf16>
    %8 = vector.shape_cast %7 : vector<1x32x16xbf16> to vector<32x16xbf16>
    %cst_10 = arith.constant dense<0.000000e+00> : vector<24x16xf32>
    %9 = tpu.matmul %6, %8, %cst_10 {dimension_numbers = #tpu.dot_dimension_numbers<[1], [0], [0], [1], [0, 0, 1, 1], [], []>} : vector<24x32xbf16>, vector<32x16xbf16>, vector<24x16xf32> -> vector<24x16xf32>
    %10 = arith.addf %4, %9 : vector<24x16xf32>
    %c0_11 = arith.constant 0 : index
    %c2 = arith.constant 2 : index
    %c0_12 = arith.constant 0 : index
    %11 = vector.load %arg1[%c0_11, %c2, %c0_12] : memref<1x32x32xbf16, #tpu.memory_space<vmem>>, vector<1x24x32xbf16>
    %12 = vector.shape_cast %11 : vector<1x24x32xbf16> to vector<24x32xbf16>
    %c2_13 = arith.constant 2 : index
    %c0_14 = arith.constant 0 : index
    %c0_15 = arith.constant 0 : index
    %13 = vector.load %arg2[%c2_13, %c0_14, %c0_15] : memref<5x32x16xbf16, #tpu.memory_space<vmem>>, vector<1x32x16xbf16>
    %14 = vector.shape_cast %13 : vector<1x32x16xbf16> to vector<32x16xbf16>
    %cst_16 = arith.constant dense<0.000000e+00> : vector<24x16xf32>
    %15 = tpu.matmul %12, %14, %cst_16 {dimension_numbers = #tpu.dot_dimension_numbers<[1], [0], [0], [1], [0, 0, 1, 1], [], []>} : vector<24x32xbf16>, vector<32x16xbf16>, vector<24x16xf32> -> vector<24x16xf32>
    %16 = arith.addf %10, %15 : vector<24x16xf32>
    %c0_17 = arith.constant 0 : index
    %c3 = arith.constant 3 : index
    %c0_18 = arith.constant 0 : index
    %17 = vector.load %arg1[%c0_17, %c3, %c0_18] : memref<1x32x32xbf16, #tpu.memory_space<vmem>>, vector<1x24x32xbf16>
    %18 = vector.shape_cast %17 : vector<1x24x32xbf16> to vector<24x32xbf16>
    %c3_19 = arith.constant 3 : index
    %c0_20 = arith.constant 0 : index
    %c0_21 = arith.constant 0 : index
    %19 = vector.load %arg2[%c3_19, %c0_20, %c0_21] : memref<5x32x16xbf16, #tpu.memory_space<vmem>>, vector<1x32x16xbf16>
    %20 = vector.shape_cast %19 : vector<1x32x16xbf16> to vector<32x16xbf16>
    %cst_22 = arith.constant dense<0.000000e+00> : vector<24x16xf32>
    %21 = tpu.matmul %18, %20, %cst_22 {dimension_numbers = #tpu.dot_dimension_numbers<[1], [0], [0], [1], [0, 0, 1, 1], [], []>} : vector<24x32xbf16>, vector<32x16xbf16>, vector<24x16xf32> -> vector<24x16xf32>
    %22 = arith.addf %16, %21 : vector<24x16xf32>
    %c0_23 = arith.constant 0 : index
    %c4 = arith.constant 4 : index
    %c0_24 = arith.constant 0 : index
    %23 = vector.load %arg1[%c0_23, %c4, %c0_24] : memref<1x32x32xbf16, #tpu.memory_space<vmem>>, vector<1x24x32xbf16>
    %24 = vector.shape_cast %23 : vector<1x24x32xbf16> to vector<24x32xbf16>
    %c4_25 = arith.constant 4 : index
    %c0_26 = arith.constant 0 : index
    %c0_27 = arith.constant 0 : index
    %25 = vector.load %arg2[%c4_25, %c0_26, %c0_27] : memref<5x32x16xbf16, #tpu.memory_space<vmem>>, vector<1x32x16xbf16>
    %26 = vector.shape_cast %25 : vector<1x32x16xbf16> to vector<32x16xbf16>
    %cst_28 = arith.constant dense<0.000000e+00> : vector<24x16xf32>
    %27 = tpu.matmul %24, %26, %cst_28 {dimension_numbers = #tpu.dot_dimension_numbers<[1], [0], [0], [1], [0, 0, 1, 1], [], []>} : vector<24x32xbf16>, vector<32x16xbf16>, vector<24x16xf32> -> vector<24x16xf32>
    %28 = arith.addf %22, %27 : vector<24x16xf32>
    %c0_29 = arith.constant 0 : index
    %c0_30 = arith.constant 0 : index
    %29 = vector.load %arg3[%c0_29, %c0_30] : memref<1x16xf32, #tpu.memory_space<vmem>>, vector<1x16xf32>
    %30 = vector.broadcast %29 : vector<1x16xf32> to vector<24x16xf32>
    %31 = arith.addf %28, %30 : vector<24x16xf32>
    %cst_31 = arith.constant dense<0.000000e+00> : vector<24xf32>
    %32 = vector.multi_reduction <add>, %31, %cst_31 [1] : vector<24x16xf32> to vector<24xf32>
    %33 = vector.shape_cast %32 : vector<24xf32> to vector<24x1xf32>
    %cst_32 = arith.constant 6.250000e-02 : f32
    %34 = vector.broadcast %cst_32 : f32 to vector<24x1xf32>
    %35 = arith.mulf %33, %34 : vector<24x1xf32>
    %36 = arith.mulf %31, %31 : vector<24x16xf32>
    %cst_33 = arith.constant dense<0.000000e+00> : vector<24xf32>
    %37 = vector.multi_reduction <add>, %36, %cst_33 [1] : vector<24x16xf32> to vector<24xf32>
    %38 = vector.shape_cast %37 : vector<24xf32> to vector<24x1xf32>
    %cst_34 = arith.constant 6.250000e-02 : f32
    %39 = vector.broadcast %cst_34 : f32 to vector<24x1xf32>
    %40 = arith.mulf %38, %39 : vector<24x1xf32>
    %41 = arith.mulf %35, %35 : vector<24x1xf32>
    %42 = arith.subf %40, %41 : vector<24x1xf32>
    %cst_35 = arith.constant 0.000000e+00 : f32
    %43 = vector.broadcast %cst_35 : f32 to vector<24x1xf32>
    %44 = arith.maximumf %42, %43 : vector<24x1xf32>
    %45 = vector.broadcast %35 : vector<24x1xf32> to vector<24x16xf32>
    %46 = arith.subf %31, %45 : vector<24x16xf32>
    %cst_36 = arith.constant 9.99999974E-6 : f32
    %47 = vector.broadcast %cst_36 : f32 to vector<24x1xf32>
    %48 = arith.addf %44, %47 : vector<24x1xf32>
    %49 = math.rsqrt %48 : vector<24x1xf32>
    %50 = vector.broadcast %49 : vector<24x1xf32> to vector<24x16xf32>
    %51 = arith.mulf %46, %50 : vector<24x16xf32>
    %c0_37 = arith.constant 0 : index
    %c0_38 = arith.constant 0 : index
    %52 = vector.load %arg4[%c0_37, %c0_38] : memref<1x16xf32, #tpu.memory_space<vmem>>, vector<1x16xf32>
    %53 = vector.broadcast %52 : vector<1x16xf32> to vector<24x16xf32>
    %54 = arith.mulf %51, %53 : vector<24x16xf32>
    %c0_39 = arith.constant 0 : index
    %c0_40 = arith.constant 0 : index
    %55 = vector.load %arg5[%c0_39, %c0_40] : memref<1x16xf32, #tpu.memory_space<vmem>>, vector<1x16xf32>
    %56 = vector.broadcast %55 : vector<1x16xf32> to vector<24x16xf32>
    %57 = arith.addf %54, %56 : vector<24x16xf32>
    %cst_41 = arith.constant 5.000000e-01 : f32
    %58 = vector.broadcast %cst_41 : f32 to vector<24x16xf32>
    %59 = arith.mulf %58, %57 : vector<24x16xf32>
    %cst_42 = arith.constant 4.471500e-02 : f32
    %60 = vector.broadcast %cst_42 : f32 to vector<24x16xf32>
    %61 = arith.mulf %60, %57 : vector<24x16xf32>
    %62 = arith.mulf %61, %57 : vector<24x16xf32>
    %63 = arith.mulf %62, %57 : vector<24x16xf32>
    %64 = arith.addf %57, %63 : vector<24x16xf32>
    %cst_43 = arith.constant 0.797884583 : f32
    %65 = vector.broadcast %cst_43 : f32 to vector<24x16xf32>
    %66 = arith.mulf %65, %64 : vector<24x16xf32>
    %67 = math.tanh %66 : vector<24x16xf32>
    %cst_44 = arith.constant 1.000000e+00 : f32
    %68 = vector.broadcast %cst_44 : f32 to vector<24x16xf32>
    %69 = arith.addf %68, %67 : vector<24x16xf32>
    %70 = arith.mulf %59, %69 : vector<24x16xf32>
    %c0_45 = arith.constant 0 : index
    %c0_46 = arith.constant 0 : index
    %71 = vector.load %arg6[%c0_45, %c0_46] : memref<24x16xf32, #tpu.memory_space<vmem>>, vector<24x16xf32>
    tpu.vector_store %arg6[%c0_45, %c0_46], %70 {strides = array<i32>} : memref<24x16xf32, #tpu.memory_space<vmem>>, vector<24x16xf32>,
    return
  }
  func.func @transform_0(%arg0: i32) -> (i32, i32, i32) {
    %c0_i32 = arith.constant 0 : i32
    %c0_i32_0 = arith.constant 0 : i32
    %c0_i32_1 = arith.constant 0 : i32
    return %arg0, %c0_i32, %c0_i32_0 : i32, i32, i32
  }
  func.func @transform_1(%arg0: i32) -> (i32, i32, i32) {
    %c0_i32 = arith.constant 0 : i32
    %c0_i32_0 = arith.constant 0 : i32
    %c0_i32_1 = arith.constant 0 : i32
    %c0_i32_2 = arith.constant 0 : i32
    return %c0_i32, %c0_i32_0, %c0_i32_1 : i32, i32, i32
  }
  func.func @transform_2(%arg0: i32) -> (i32, i32) {
    %c0_i32 = arith.constant 0 : i32
    %c0_i32_0 = arith.constant 0 : i32
    %c0_i32_1 = arith.constant 0 : i32
    return %c0_i32, %c0_i32_0 : i32, i32
  }
  func.func @transform_3(%arg0: i32) -> (i32, i32) {
    %c0_i32 = arith.constant 0 : i32
    %c0_i32_0 = arith.constant 0 : i32
    %c0_i32_1 = arith.constant 0 : i32
    return %c0_i32, %c0_i32_0 : i32, i32
  }
  func.func @transform_4(%arg0: i32) -> (i32, i32) {
    %c0_i32 = arith.constant 0 : i32
    %c0_i32_0 = arith.constant 0 : i32
    %c0_i32_1 = arith.constant 0 : i32
    return %c0_i32, %c0_i32_0 : i32, i32
  }
  func.func @transform_5(%arg0: i32) -> (i32, i32) {
    %c0_i32 = arith.constant 0 : i32
    %c0_i32_0 = arith.constant 0 : i32
    return %arg0, %c0_i32 : i32, i32
  }
}

</mosaic_0001>

<llo_original>
// kernel: input_conv1d_forward.1
$region0: #{input_conv1d_forward.1}
  #allocation0 [shape = 'u32[]', space=smem, size = 0x4, offset = 0x4, fixed_abs, tag = 'smem constant byte address 0x4 - core index']
  #allocation1 [shape = 'u32[144,128]{1,0:T(1,128)}', space=vmem, size = 0x12000, scoped, tag = 'internal scratch']
  %s0 = inlined_call_operand.vmem [shape: bf16[4,32,32], index: 0, kind: input, shape index: {}]
  %s1 = inlined_call_operand.vmem [shape: bf16[5,32,16], index: 1, kind: input, shape index: {}]
  %s2 = inlined_call_operand.vmem [shape: f32[1,16], index: 2, kind: input, shape index: {}]
  %s3 = inlined_call_operand.vmem [shape: f32[1,16], index: 3, kind: input, shape index: {}]
  %s4 = inlined_call_operand.vmem [shape: f32[1,16], index: 4, kind: input, shape index: {}]
  %s5 = inlined_call_operand.vmem [shape: f32[96,16], index: 5, kind: output, shape index: {}]
  %s6 = sld [smem:[#allocation0]]
  $region53: #{input_conv1d_forward.1} parent=0
    _
  %s8 = ssub.s32 1, %s6
  %s9 = scalar_select 0, %s8, %s6
  loop: start=0, step=1, limit=6
  $region2: #{input_conv1d_forward.1} parent=0 // loop_pre_header
    _
  $region3: #{input_conv1d_forward.1} parent=0 // loop_header
    %s11 = sphi 0, %s15
    %p12 = scmp.ge.s32.totalorder %s11, 6
    %s21 = sphi 0, %s23
    %s24 = sphi 0, %s21
    %s25 = sphi 0, %s24
    %s41 = sphi 0, %s25
    %s45 = sphi 0, %s45
    %s47 = sphi 0, %s45
    %s48 = sphi 0, %s47
    %s62 = sphi 0, %s48
    %s66 = sphi 0, %s66
    %s68 = sphi 0, %s66
    %s69 = sphi 0, %s68
    %s83 = sphi 0, %s69
    %s87 = sphi 0, %s87
    %s89 = sphi 0, %s87
    %s90 = sphi 0, %s89
    %s104 = sphi 0, %s90
    %s108 = sphi 0, %s108
    %s110 = sphi 0, %s108
    %s111 = sphi 0, %s110
    %s125 = sphi 0, %s111
    %s131 = sphi 0, %s133
    %s134 = sphi 0, %s131
    %s135 = sphi 0, %s134
    %s151 = sphi 0, %s135
  $region4: #{input_conv1d_forward.1} parent=0 // loop_header_branch
    %14 = sbr.rel (%p12) target = $region8
  $region5: #{input_conv1d_forward.1} parent=0 // loop_body
    %s16 = ssub.s32 %s11, 1
    %s17 = ssub.s32 %s11, 2
    %s18 = sadd.s32 %s11, 1
    %s19 = ssub.s32 %s11, %s18
    %p20 = scmp.eq.s32.totalorder %s19, 0
    %s22 = sadd.s32 %s21, 1
    %s23 = scalar_select %p20, %s21, %s22
    %p26 = pneg %p20
    %p27 = scmp.eq.s32.totalorder %s11, 3
    %p28 = por %p26, %p27
    %p29 = scmp.ne.s32.totalorder %s21, %s24
    %p30 = scmp.eq.s32.totalorder %s11, 0
    %p31 = por %p29, %p30
    %p32 = scmp.ne.s32.totalorder %s21, %s24
    %p33 = scmp.eq.s32.totalorder %s16, 3
    %p34 = por %p32, %p33
    %p35 = scmp.ne.s32.totalorder %s24, %s25
    %p36 = scmp.eq.s32.totalorder %s16, 0
    %p37 = por %p35, %p36
    %p38 = scmp.ne.s32.totalorder %s24, %s25
    %p39 = scmp.eq.s32.totalorder %s17, 3
    %p40 = por %p38, %p39
    %p42 = scmp.ne.s32.totalorder %s25, %s41
    %p43 = scmp.eq.s32.totalorder %s17, 0
    %p44 = por %p42, %p43
    %s46 = sadd.s32 %s45, 1
    %p49 = scmp.eq.s32.totalorder %s11, 3
    %p50 = scmp.ne.s32.totalorder %s45, %s47
    %p51 = scmp.eq.s32.totalorder %s11, 0
    %p52 = por %p50, %p51
    %p53 = scmp.ne.s32.totalorder %s45, %s47
    %p54 = scmp.eq.s32.totalorder %s16, 3
    %p55 = por %p53, %p54
    %p56 = scmp.ne.s32.totalorder %s47, %s48
    %p57 = scmp.eq.s32.totalorder %s16, 0
    %p58 = por %p56, %p57
    %p59 = scmp.ne.s32.totalorder %s47, %s48
    %p60 = scmp.eq.s32.totalorder %s17, 3
    %p61 = por %p59, %p60
    %p63 = scmp.ne.s32.totalorder %s48, %s62
    %p64 = scmp.eq.s32.totalorder %s17, 0
    %p65 = por %p63, %p64
    %s67 = sadd.s32 %s66, 1
    %p70 = scmp.eq.s32.totalorder %s11, 3
    %p71 = scmp.ne.s32.totalorder %s66, %s68
    %p72 = scmp.eq.s32.totalorder %s11, 0
    %p73 = por %p71, %p72
    %p74 = scmp.ne.s32.totalorder %s66, %s68
    %p75 = scmp.eq.s32.totalorder %s16, 3
    %p76 = por %p74, %p75
    %p77 = scmp.ne.s32.totalorder %s68, %s69
    %p78 = scmp.eq.s32.totalorder %s16, 0
    %p79 = por %p77, %p78
    %p80 = scmp.ne.s32.totalorder %s68, %s69
    %p81 = scmp.eq.s32.totalorder %s17, 3
    %p82 = por %p80, %p81
    %p84 = scmp.ne.s32.totalorder %s69, %s83
    %p85 = scmp.eq.s32.totalorder %s17, 0
    %p86 = por %p84, %p85
    %s88 = sadd.s32 %s87, 1
    %p91 = scmp.eq.s32.totalorder %s11, 3
    %p92 = scmp.ne.s32.totalorder %s87, %s89
    %p93 = scmp.eq.s32.totalorder %s11, 0
    %p94 = por %p92, %p93
    %p95 = scmp.ne.s32.totalorder %s87, %s89
    %p96 = scmp.eq.s32.totalorder %s16, 3
    %p97 = por %p95, %p96
    %p98 = scmp.ne.s32.totalorder %s89, %s90
    %p99 = scmp.eq.s32.totalorder %s16, 0
    %p100 = por %p98, %p99
    %p101 = scmp.ne.s32.totalorder %s89, %s90
    %p102 = scmp.eq.s32.totalorder %s17, 3
    %p103 = por %p101, %p102
    %p105 = scmp.ne.s32.totalorder %s90, %s104
    %p106 = scmp.eq.s32.totalorder %s17, 0
    %p107 = por %p105, %p106
    %s109 = sadd.s32 %s108, 1
    %p112 = scmp.eq.s32.totalorder %s11, 3
    %p113 = scmp.ne.s32.totalorder %s108, %s110
    %p114 = scmp.eq.s32.totalorder %s11, 0
    %p115 = por %p113, %p114
    %p116 = scmp.ne.s32.totalorder %s108, %s110
    %p117 = scmp.eq.s32.totalorder %s16, 3
    %p118 = por %p116, %p117
    %p119 = scmp.ne.s32.totalorder %s110, %s111
    %p120 = scmp.eq.s32.totalorder %s16, 0
    %p121 = por %p119, %p120
    %p122 = scmp.ne.s32.totalorder %s110, %s111
    %p123 = scmp.eq.s32.totalorder %s17, 3
    %p124 = por %p122, %p123
    %p126 = scmp.ne.s32.totalorder %s111, %s125
    %p127 = scmp.eq.s32.totalorder %s17, 0
    %p128 = por %p126, %p127
    %s129 = ssub.s32 %s11, %s18
    %p130 = scmp.eq.s32.totalorder %s129, 0
    %s132 = sadd.s32 %s131, 1
    %s133 = scalar_select %p130, %s131, %s132
    %p136 = pneg %p130
    %p137 = scmp.eq.s32.totalorder %s11, 3
    %p138 = por %p136, %p137
    %p139 = scmp.ne.s32.totalorder %s131, %s134
    %p140 = scmp.eq.s32.totalorder %s11, 0
    %p141 = por %p139, %p140
    %p142 = scmp.ne.s32.totalorder %s131, %s134
    %p143 = scmp.eq.s32.totalorder %s16, 3
    %p144 = por %p142, %p143
    %p145 = scmp.ne.s32.totalorder %s134, %s135
    %p146 = scmp.eq.s32.totalorder %s16, 0
    %p147 = por %p145, %p146
    %p148 = scmp.ne.s32.totalorder %s134, %s135
    %p149 = scmp.eq.s32.totalorder %s17, 3
    %p150 = por %p148, %p149
    %p152 = scmp.ne.s32.totalorder %s135, %s151
    %p153 = scmp.eq.s32.totalorder %s17, 0
    %p154 = por %p152, %p153
    %p155 = scmp.le.s32.totalorder 1, %s11
    %p156 = scmp.lt.s32.totalorder %s11, 5
    %p157 = pnand %p155, %p156
    %p158 = pneg %p157
    // Predicated region
    $region9: #{input_conv1d_forward.1} parent=5 // pred_check
      _
    $region10: #{input_conv1d_forward.1} parent=5 // pred_check_branch
      %160 = sbr.rel (%p157) target = $region12
    $region11: #{input_conv1d_forward.1} parent=5 // pred_region
      %s161 = ssub.s32 %s11, 1
      // Predicated region
      $region13: #{input_conv1d_forward.1} parent=11 // pred_check
        %p162 = pneg %p58
      $region14: #{input_conv1d_forward.1} parent=11 // pred_check_branch
        %164 = sbr.rel (%p162) target = $region16
      $region15: #{input_conv1d_forward.1} parent=11 // pred_region
        _
      $region16: #{input_conv1d_forward.1} parent=11 // pred_fallthru
        _
      // Predicated region
      $region17: #{input_conv1d_forward.1} parent=11 // pred_check
        %p165 = pneg %p79
      $region18: #{input_conv1d_forward.1} parent=11 // pred_check_branch
        %167 = sbr.rel (%p165) target = $region20
      $region19: #{input_conv1d_forward.1} parent=11 // pred_region
        _
      $region20: #{input_conv1d_forward.1} parent=11 // pred_fallthru
        _
      // Predicated region
      $region21: #{input_conv1d_forward.1} parent=11 // pred_check
        %p168 = pneg %p100
      $region22: #{input_conv1d_forward.1} parent=11 // pred_check_branch
        %170 = sbr.rel (%p168) target = $region24
      $region23: #{input_conv1d_forward.1} parent=11 // pred_region
        _
      $region24: #{input_conv1d_forward.1} parent=11 // pred_fallthru
        _
      // Predicated region
      $region25: #{input_conv1d_forward.1} parent=11 // pred_check
        %p171 = pneg %p121
      $region26: #{input_conv1d_forward.1} parent=11 // pred_check_branch
        %173 = sbr.rel (%p171) target = $region28
      $region27: #{input_conv1d_forward.1} parent=11 // pred_region
        _
      $region28: #{input_conv1d_forward.1} parent=11 // pred_fallthru
        _
    $region12: #{input_conv1d_forward.1} parent=5 // pred_fallthru
      _
    %p174 = scmp.lt.s32.totalorder %s11, 4
    // Predicated region
    $region29: #{input_conv1d_forward.1} parent=5 // pred_check
      %p175 = pneg %p174
    $region30: #{input_conv1d_forward.1} parent=5 // pred_check_branch
      %177 = sbr.rel (%p175) target = $region32
    $region31: #{input_conv1d_forward.1} parent=5 // pred_region
      // Predicated region
      $region33: #{input_conv1d_forward.1} parent=31 // pred_check
        %p178 = pneg %p31
      $region34: #{input_conv1d_forward.1} parent=31 // pred_check_branch
        %180 = sbr.rel (%p178) target = $region36
      $region35: #{input_conv1d_forward.1} parent=31 // pred_region
        %p181 = scmp.lt.s32.totalorder %s11, 3
        %s182 = scalar_select %p181, %s11, 3
        %s183 = smul.addr %s182, 4
        %s184 = smul.addr %s183, 4
        %s185 = scalar_lea.vmem %s0, %s184
      $region36: #{input_conv1d_forward.1} parent=31 // pred_fallthru
        _
    $region32: #{input_conv1d_forward.1} parent=5 // pred_fallthru
      _
    %p186 = scmp.le.s32.totalorder 1, %s11
    %p187 = scmp.lt.s32.totalorder %s11, 5
    %p188 = pnand %p186, %p187
    %p189 = pneg %p188
    // Predicated region
    $region37: #{input_conv1d_forward.1} parent=5 // pred_check
      _
    $region38: #{input_conv1d_forward.1} parent=5 // pred_check_branch
      %191 = sbr.rel (%p188) target = $region40
    $region39: #{input_conv1d_forward.1} parent=5 // pred_region
      %s192 = ssub.s32 %s11, 1
      %p193 = scmp.lt.s32.totalorder %s16, 3
      %s194 = scalar_select %p193, %s16, 3
      %s195 = smul.addr %s194, 4
      %s196 = smul.addr %s195, 4
      %s197 = scalar_lea.vmem %s0, %s196
      %p198 = pneg %p37
      %p199 = pneg %p34
      %p200 = pneg %p58
      %p201 = pneg %p55
      %p202 = pneg %p79
      %p203 = pneg %p76
      %p204 = pneg %p100
      %p205 = pneg %p97
      %p206 = pneg %p121
      %p207 = pneg %p118
      %p208 = pneg %p147
      %p209 = pneg %p144
      %s210 = smul.u32 3, %s16
      %p211 = scmp.lt.s32.totalorder %s210, 11
      %s212 = scalar_select %p211, %s210, 11
      %s213 = smul.addr %s212, 8
      %s214 = scalar_lea.vmem %s5, %s213
      %p215 = scmp.lt.s32.totalorder %s16, 3
      %s216 = scalar_select %p215, %s16, 3
      %s217 = smul.addr %s216, 4
      %s218 = smul.addr %s217, 4
      %s219 = scalar_lea.vmem %s0, %s218
      %s220 = smul.u32 3, %s16
      %p221 = scmp.lt.s32.totalorder %s220, 11
      %s222 = scalar_select %p221, %s220, 11
      %s223 = smul.addr %s222, 8
      %s224 = scalar_lea.vmem %s5, %s223
      %s225 = smul.u32 3, %s16
      %v227 = vld [vmem:[%s219] sm:$0xf]
      %v228 = vld [vmem:[%s219 + $0x4] sm:$0xf]
      %v229 = vld [vmem:[%s219 + $0x8] sm:$0xf]
      %v230 = vld [vmem:[%s1] sm:$0xf]
      %v231 = vld [vmem:[%s1 + $0x4] sm:$0xf]
      %v232 = vld [vmem:[%s1 + $0x8] sm:$0xf]
      %v233 = vld [vmem:[%s1 + $0xc] sm:$0xf]
      %v234 = vld [vmem:[%s219 + $0xc] sm:$0x1]
      %s235 = scalar_lea.vmem %s1, 16
      %v236 = vld [vmem:[%s235] sm:$0xf]
      %v237 = vld [vmem:[%s235 + $0x4] sm:$0xf]
      %v238 = vld [vmem:[%s235 + $0x8] sm:$0xf]
      %v239 = vld [vmem:[%s235 + $0xc] sm:$0xf]
      %v244 = vunpack.c.l.b16 %v227
      %v245 = vunpack.c.l.b16 %v228
      %v246 = vunpack.c.l.b16 %v229
      %v247 = vunpack.c.l.b16 %v234
      %v248 = vpack.c.b16 %v245, %v244
      %v249 = vpack.c.b16 %v247, %v246
      %vm250 = vsmask.f32 7424
      %v252 = vshrl.u32 %v248, 16
      %v254 = vshll.u32 %v248, 16
      %v256 = vrot.slane %v254, 1
      %v257 = vor.u32 %v252, %v256
      %v259 = vshll.u32 %v249, 16
      %v261 = vrot.slane %v259, 1
      %v262 = vsel %vm250, %v257, %v261
      %v263 = vshrl.u32 %v249, 16
      %v265 = vor.u32 %v263, %v261
      %v270 = vunpack.c.l.b16 %v236
      %v271 = vunpack.c.l.b16 %v237
      %v272 = vunpack.c.l.b16 %v238
      %v273 = vunpack.c.l.b16 %v239
      %v274 = vpack.c.b16 %v271, %v270
      %v275 = vpack.c.b16 %v273, %v272
      %vm278 = vcmask 261120
      %v280 = vsel %vm278, %v262, 0
      %v283 = vsel %vm278, %v265, 0
      %285 = vmatprep.subr.bf16.mxu0 0
      %286 = vmatpush1.bf16.msra.mxu0 %v274
      %287 = vmatprep.subr.bf16.mxu0 0
      %288 = vmatpush1.bf16.msra.mxu0 %v275
      %289 = vmatprep.subr.bf16.mxu0 0
      %290 = vmatpush1.bf16.msra.mxu0 0
      %291 = vmatprep.subr.bf16.mxu0 0
      %292 = vmatpush1.bf16.msra.mxu0 0
      %293 = vmatprep.subr.bf16.mxu0 0
      %294 = vmatpush1.bf16.msra.mxu0 0
      %295 = vmatprep.subr.bf16.mxu0 0
      %296 = vmatpush1.bf16.msra.mxu0 0
      %297 = vmatprep.subr.bf16.mxu0 0
      %298 = vmatpush1.bf16.msra.mxu0 0
      %299 = vmatprep.subr.bf16.mxu0 0
      %300 = vmatpush1.bf16.msra.mxu0 0
      %301 = vmatprep.subr.bf16.mxu0 0
      %302 = vmatpush1.bf16.msra.mxu0 0
      %303 = vmatprep.subr.bf16.mxu0 0
      %304 = vmatpush1.bf16.msra.mxu0 0
      %305 = vmatprep.subr.bf16.mxu0 0
      %306 = vmatpush1.bf16.msra.mxu0 0
      %307 = vmatprep.subr.bf16.mxu0 0
      %308 = vmatpush1.bf16.msra.mxu0 0
      %309 = vmatprep.subr.bf16.mxu0 0
      %310 = vmatpush1.bf16.msra.mxu0 0
      %311 = vmatprep.subr.bf16.mxu0 0
      %312 = vmatpush1.bf16.msra.mxu0 0
      %313 = vmatprep.subr.bf16.mxu0 0
      %314 = vmatpush1.bf16.msra.mxu0 0
      %315 = vmatprep.subr.bf16.mxu0 0
      %316 = vmatpush1.bf16.msra.mxu0 0
      %317 = vmatprep.mubr.bf16.mxu0 0
      %318 = vmatmul.mubr.bf16.gmra.mrb[0].mxu0 %v280
      %v319 = vpop.f32.mrb[0].mxu0
      %v320 = vadd.f32 0.0, %v319
      %v321 = vpop.f32.mrb[0].mxu0
      %v322 = vpop.f32.mrb[0].mxu0
      %v323 = vadd.f32 0.0, %v322
      %v324 = vpop.f32.mrb[0].mxu0
      %325 = vmatprep.mubr.bf16.mxu0 0
      %326 = vmatmul.mubr.bf16.gmra.mrb[0].mxu0 %v283
      %v327 = vpop.f32.mrb[0].mxu0
      %v328 = vadd.f32 0.0, %v327
      %v329 = vpop.f32.mrb[0].mxu0
      %v330 = vpop.f32.mrb[0].mxu0
      %v331 = vpop.f32.mrb[0].mxu0
      %332 = vdwg.mxu0
      %v333 = vpack.c.b16 %v246, %v246
      %v338 = vunpack.c.l.b16 %v230
      %v339 = vunpack.c.l.b16 %v231
      %v340 = vunpack.c.l.b16 %v232
      %v341 = vunpack.c.l.b16 %v233
      %v342 = vpack.c.b16 %v339, %v338
      %v343 = vpack.c.b16 %v341, %v340
      %v346 = vsel %vm278, %v248, 0
      %v349 = vsel %vm278, %v333, 0
      %351 = vmatprep.subr.bf16.mxu0 0
      %352 = vmatpush1.bf16.msra.mxu0 %v342
      %353 = vmatprep.subr.bf16.mxu0 0
      %354 = vmatpush1.bf16.msra.mxu0 %v343
      %355 = vmatprep.subr.bf16.mxu0 0
      %356 = vmatpush1.bf16.msra.mxu0 0
      %357 = vmatprep.subr.bf16.mxu0 0
      %358 = vmatpush1.bf16.msra.mxu0 0
      %359 = vmatprep.subr.bf16.mxu0 0
      %360 = vmatpush1.bf16.msra.mxu0 0
      %361 = vmatprep.subr.bf16.mxu0 0
      %362 = vmatpush1.bf16.msra.mxu0 0
      %363 = vmatprep.subr.bf16.mxu0 0
      %364 = vmatpush1.bf16.msra.mxu0 0
      %365 = vmatprep.subr.bf16.mxu0 0
      %366 = vmatpush1.bf16.msra.mxu0 0
      %367 = vmatprep.subr.bf16.mxu0 0
      %368 = vmatpush1.bf16.msra.mxu0 0
      %369 = vmatprep.subr.bf16.mxu0 0
      %370 = vmatpush1.bf16.msra.mxu0 0
      %371 = vmatprep.subr.bf16.mxu0 0
      %372 = vmatpush1.bf16.msra.mxu0 0
      %373 = vmatprep.subr.bf16.mxu0 0
      %374 = vmatpush1.bf16.msra.mxu0 0
      %375 = vmatprep.subr.bf16.mxu0 0
      %376 = vmatpush1.bf16.msra.mxu0 0
      %377 = vmatprep.subr.bf16.mxu0 0
      %378 = vmatpush1.bf16.msra.mxu0 0
      %379 = vmatprep.subr.bf16.mxu0 0
      %380 = vmatpush1.bf16.msra.mxu0 0
      %381 = vmatprep.subr.bf16.mxu0 0
      %382 = vmatpush1.bf16.msra.mxu0 0
      %383 = vmatprep.mubr.bf16.mxu0 0
      %384 = vmatmul.mubr.bf16.gmra.mrb[0].mxu0 %v346
      %v385 = vpop.f32.mrb[0].mxu0
      %v386 = vadd.f32 %v320, %v385
      %v387 = vpop.f32.mrb[0].mxu0
      %v388 = vpop.f32.mrb[0].mxu0
      %v389 = vadd.f32 %v323, %v388
      %v390 = vpop.f32.mrb[0].mxu0
      %391 = vmatprep.mubr.bf16.mxu0 0
      %392 = vmatmul.mubr.bf16.gmra.mrb[0].mxu0 %v349
      %v393 = vpop.f32.mrb[0].mxu0
      %v394 = vadd.f32 %v328, %v393
      %v395 = vpop.f32.mrb[0].mxu0
      %v396 = vpop.f32.mrb[0].mxu0
      %v397 = vpop.f32.mrb[0].mxu0
      %398 = vdwg.mxu0
      %v399 = vld [vmem:[%s219] sm:$0xe]
      %s400 = scalar_lea.vmem %s1, 32
      %v401 = vld [vmem:[%s400] sm:$0xf]
      %v402 = vld [vmem:[%s400 + $0x4] sm:$0xf]
      %v403 = vld [vmem:[%s400 + $0x8] sm:$0xf]
      %v404 = vld [vmem:[%s400 + $0xc] sm:$0xf]
      %v406 = vunpack.c.l.b16 %v399
      %v407 = vpack.c.b16 %v245, %v406
      %vm408 = vcmask 1046528
      %v409 = vrot.slane %v407, 1
      %v410 = vrot.slane %v249, 1
      %v411 = vsel %vm408, %v409, %v410
      %v416 = vunpack.c.l.b16 %v401
      %v417 = vunpack.c.l.b16 %v402
      %v418 = vunpack.c.l.b16 %v403
      %v419 = vunpack.c.l.b16 %v404
      %v420 = vpack.c.b16 %v417, %v416
      %v421 = vpack.c.b16 %v419, %v418
      %v425 = vsel %vm278, %v411, 0
      %v428 = vsel %vm278, %v410, 0
      %430 = vmatprep.subr.bf16.mxu0 0
      %431 = vmatpush1.bf16.msra.mxu0 %v420
      %432 = vmatprep.subr.bf16.mxu0 0
      %433 = vmatpush1.bf16.msra.mxu0 %v421
      %434 = vmatprep.subr.bf16.mxu0 0
      %435 = vmatpush1.bf16.msra.mxu0 0
      %436 = vmatprep.subr.bf16.mxu0 0
      %437 = vmatpush1.bf16.msra.mxu0 0
      %438 = vmatprep.subr.bf16.mxu0 0
      %439 = vmatpush1.bf16.msra.mxu0 0
      %440 = vmatprep.subr.bf16.mxu0 0
      %441 = vmatpush1.bf16.msra.mxu0 0
      %442 = vmatprep.subr.bf16.mxu0 0
      %443 = vmatpush1.bf16.msra.mxu0 0
      %444 = vmatprep.subr.bf16.mxu0 0
      %445 = vmatpush1.bf16.msra.mxu0 0
      %446 = vmatprep.subr.bf16.mxu0 0
      %447 = vmatpush1.bf16.msra.mxu0 0
      %448 = vmatprep.subr.bf16.mxu0 0
      %449 = vmatpush1.bf16.msra.mxu0 0
      %450 = vmatprep.subr.bf16.mxu0 0
      %451 = vmatpush1.bf16.msra.mxu0 0
      %452 = vmatprep.subr.bf16.mxu0 0
      %453 = vmatpush1.bf16.msra.mxu0 0
      %454 = vmatprep.subr.bf16.mxu0 0
      %455 = vmatpush1.bf16.msra.mxu0 0
      %456 = vmatprep.subr.bf16.mxu0 0
      %457 = vmatpush1.bf16.msra.mxu0 0
      %458 = vmatprep.subr.bf16.mxu0 0
      %459 = vmatpush1.bf16.msra.mxu0 0
      %460 = vmatprep.subr.bf16.mxu0 0
      %461 = vmatpush1.bf16.msra.mxu0 0
      %462 = vmatprep.mubr.bf16.mxu0 0
      %463 = vmatmul.mubr.bf16.gmra.mrb[0].mxu0 %v425
      %v464 = vpop.f32.mrb[0].mxu0
      %v465 = vadd.f32 0.0, %v464
      %v466 = vpop.f32.mrb[0].mxu0
      %v467 = vpop.f32.mrb[0].mxu0
      %v468 = vadd.f32 0.0, %v467
      %v469 = vpop.f32.mrb[0].mxu0
      %470 = vmatprep.mubr.bf16.mxu0 0
      %471 = vmatmul.mubr.bf16.gmra.mrb[0].mxu0 %v428
      %v472 = vpop.f32.mrb[0].mxu0
      %v473 = vadd.f32 0.0, %v472
      %v474 = vpop.f32.mrb[0].mxu0
      %v475 = vpop.f32.mrb[0].mxu0
      %v476 = vpop.f32.mrb[0].mxu0
      %477 = vdwg.mxu0
      %v478 = vadd.f32 %v386, %v465
      %v479 = vadd.f32 %v389, %v468
      %v480 = vadd.f32 %v394, %v473
      %v481 = vld [vmem:[%s219 + $0xc] sm:$0x3]
      %s482 = scalar_lea.vmem %s1, 48
      %v483 = vld [vmem:[%s482] sm:$0xf]
      %v484 = vld [vmem:[%s482 + $0x4] sm:$0xf]
      %v485 = vld [vmem:[%s482 + $0x8] sm:$0xf]
      %v486 = vld [vmem:[%s482 + $0xc] sm:$0xf]
      %v488 = vunpack.c.l.b16 %v481
      %v489 = vpack.c.b16 %v488, %v246
      %vm490 = vsmask.f32 6400
      %v492 = vshrl.u32 %v407, 16
      %v494 = vrot.slane %v492, 1
      %v495 = vshll.u32 %v407, 16
      %v497 = vrot.slane %v495, 2
      %v498 = vor.u32 %v494, %v497
      %v500 = vshrl.u32 %v489, 16
      %v502 = vrot.slane %v500, 1
      %v503 = vshll.u32 %v489, 16
      %v505 = vrot.slane %v503, 2
      %v506 = vor.u32 %v502, %v505
      %v507 = vsel %vm490, %v498, %v506
      %v512 = vunpack.c.l.b16 %v483
      %v513 = vunpack.c.l.b16 %v484
      %v514 = vunpack.c.l.b16 %v485
      %v515 = vunpack.c.l.b16 %v486
      %v516 = vpack.c.b16 %v513, %v512
      %v517 = vpack.c.b16 %v515, %v514
      %v521 = vsel %vm278, %v507, 0
      %v524 = vsel %vm278, %v506, 0
      %526 = vmatprep.subr.bf16.mxu0 0
      %527 = vmatpush1.bf16.msra.mxu0 %v516
      %528 = vmatprep.subr.bf16.mxu0 0
      %529 = vmatpush1.bf16.msra.mxu0 %v517
      %530 = vmatprep.subr.bf16.mxu0 0
      %531 = vmatpush1.bf16.msra.mxu0 0
      %532 = vmatprep.subr.bf16.mxu0 0
      %533 = vmatpush1.bf16.msra.mxu0 0
      %534 = vmatprep.subr.bf16.mxu0 0
      %535 = vmatpush1.bf16.msra.mxu0 0
      %536 = vmatprep.subr.bf16.mxu0 0
      %537 = vmatpush1.bf16.msra.mxu0 0
      %538 = vmatprep.subr.bf16.mxu0 0
      %539 = vmatpush1.bf16.msra.mxu0 0
      %540 = vmatprep.subr.bf16.mxu0 0
      %541 = vmatpush1.bf16.msra.mxu0 0
      %542 = vmatprep.subr.bf16.mxu0 0
      %543 = vmatpush1.bf16.msra.mxu0 0
      %544 = vmatprep.subr.bf16.mxu0 0
      %545 = vmatpush1.bf16.msra.mxu0 0
      %546 = vmatprep.subr.bf16.mxu0 0
      %547 = vmatpush1.bf16.msra.mxu0 0
      %548 = vmatprep.subr.bf16.mxu0 0
      %549 = vmatpush1.bf16.msra.mxu0 0
      %550 = vmatprep.subr.bf16.mxu0 0
      %551 = vmatpush1.bf16.msra.mxu0 0
      %552 = vmatprep.subr.bf16.mxu0 0
      %553 = vmatpush1.bf16.msra.mxu0 0
      %554 = vmatprep.subr.bf16.mxu0 0
      %555 = vmatpush1.bf16.msra.mxu0 0
      %556 = vmatprep.subr.bf16.mxu0 0
      %557 = vmatpush1.bf16.msra.mxu0 0
      %558 = vmatprep.mubr.bf16.mxu0 0
      %559 = vmatmul.mubr.bf16.gmra.mrb[0].mxu0 %v521
      %v560 = vpop.f32.mrb[0].mxu0
      %v561 = vadd.f32 0.0, %v560
      %v562 = vpop.f32.mrb[0].mxu0
      %v563 = vpop.f32.mrb[0].mxu0
      %v564 = vadd.f32 0.0, %v563
      %v565 = vpop.f32.mrb[0].mxu0
      %566 = vmatprep.mubr.bf16.mxu0 0
      %567 = vmatmul.mubr.bf16.gmra.mrb[0].mxu0 %v524
      %v568 = vpop.f32.mrb[0].mxu0
      %v569 = vadd.f32 0.0, %v568
      %v570 = vpop.f32.mrb[0].mxu0
      %v571 = vpop.f32.mrb[0].mxu0
      %v572 = vpop.f32.mrb[0].mxu0
      %573 = vdwg.mxu0
      %v574 = vadd.f32 %v478, %v561
      %v575 = vadd.f32 %v479, %v564
      %v576 = vadd.f32 %v480, %v569
      %v577 = vld [vmem:[%s219] sm:$0xc]
      %s578 = scalar_lea.vmem %s1, 64
      %v579 = vld [vmem:[%s578] sm:$0xf]
      %v580 = vld [vmem:[%s578 + $0x4] sm:$0xf]
      %v581 = vld [vmem:[%s578 + $0x8] sm:$0xf]
      %v582 = vld [vmem:[%s578 + $0xc] sm:$0xf]
      %v584 = vunpack.c.l.b16 %v577
      %v585 = vpack.c.b16 %v245, %v584
      %vm586 = vcmask 1045504
      %v587 = vrot.slane %v585, 2
      %v588 = vrot.slane %v489, 2
      %v589 = vsel %vm586, %v587, %v588
      %v594 = vunpack.c.l.b16 %v579
      %v595 = vunpack.c.l.b16 %v580
      %v596 = vunpack.c.l.b16 %v581
      %v597 = vunpack.c.l.b16 %v582
      %v598 = vpack.c.b16 %v595, %v594
      %v599 = vpack.c.b16 %v597, %v596
      %v603 = vsel %vm278, %v589, 0
      %v606 = vsel %vm278, %v588, 0
      %608 = vmatprep.subr.bf16.mxu0 0
      %609 = vmatpush1.bf16.msra.mxu0 %v598
      %610 = vmatprep.subr.bf16.mxu0 0
      %611 = vmatpush1.bf16.msra.mxu0 %v599
      %612 = vmatprep.subr.bf16.mxu0 0
      %613 = vmatpush1.bf16.msra.mxu0 0
      %614 = vmatprep.subr.bf16.mxu0 0
      %615 = vmatpush1.bf16.msra.mxu0 0
      %616 = vmatprep.subr.bf16.mxu0 0
      %617 = vmatpush1.bf16.msra.mxu0 0
      %618 = vmatprep.subr.bf16.mxu0 0
      %619 = vmatpush1.bf16.msra.mxu0 0
      %620 = vmatprep.subr.bf16.mxu0 0
      %621 = vmatpush1.bf16.msra.mxu0 0
      %622 = vmatprep.subr.bf16.mxu0 0
      %623 = vmatpush1.bf16.msra.mxu0 0
      %624 = vmatprep.subr.bf16.mxu0 0
      %625 = vmatpush1.bf16.msra.mxu0 0
      %626 = vmatprep.subr.bf16.mxu0 0
      %627 = vmatpush1.bf16.msra.mxu0 0
      %628 = vmatprep.subr.bf16.mxu0 0
      %629 = vmatpush1.bf16.msra.mxu0 0
      %630 = vmatprep.subr.bf16.mxu0 0
      %631 = vmatpush1.bf16.msra.mxu0 0
      %632 = vmatprep.subr.bf16.mxu0 0
      %633 = vmatpush1.bf16.msra.mxu0 0
      %634 = vmatprep.subr.bf16.mxu0 0
      %635 = vmatpush1.bf16.msra.mxu0 0
      %636 = vmatprep.subr.bf16.mxu0 0
      %637 = vmatpush1.bf16.msra.mxu0 0
      %638 = vmatprep.subr.bf16.mxu0 0
      %639 = vmatpush1.bf16.msra.mxu0 0
      %640 = vmatprep.mubr.bf16.mxu0 0
      %641 = vmatmul.mubr.bf16.gmra.mrb[0].mxu0 %v603
      %v642 = vpop.f32.mrb[0].mxu0
      %v643 = vadd.f32 0.0, %v642
      %v644 = vpop.f32.mrb[0].mxu0
      %v645 = vpop.f32.mrb[0].mxu0
      %v646 = vadd.f32 0.0, %v645
      %v647 = vpop.f32.mrb[0].mxu0
      %648 = vmatprep.mubr.bf16.mxu0 0
      %649 = vmatmul.mubr.bf16.gmra.mrb[0].mxu0 %v606
      %v650 = vpop.f32.mrb[0].mxu0
      %v651 = vadd.f32 0.0, %v650
      %v652 = vpop.f32.mrb[0].mxu0
      %v653 = vpop.f32.mrb[0].mxu0
      %v654 = vpop.f32.mrb[0].mxu0
      %655 = vdwg.mxu0
      %v656 = vadd.f32 %v574, %v643
      %v657 = vadd.f32 %v575, %v646
      %v658 = vadd.f32 %v576, %v651
      %v659 = vld [vmem:[%s2] sm:$0x1]
      %v661 = vlaneseq
      %v662 = vshrl.u32 %v661, 7
      %v663 = vsub.s32 0, %v662
      %v664 = vrot.slane %v659, %v663
      %v666 = vadd.f32 %v656, %v664
      %v667 = vadd.f32 %v657, %v664
      %v668 = vadd.f32 %v658, %v664
      %vm669 = vcmask 130048
      %v670 = vsel %vm669, %v666, 0.0
      %671 = vadd.xlane.f32.xlu0 %v670
      %v672 = vpop.xlane.xlu0 %671
      %v673 = vsel %vm669, %v667, 0.0
      %674 = vadd.xlane.f32.xlu0 %v673
      %v675 = vpop.xlane.xlu0 %674
      %v676 = vsel %vm669, %v668, 0.0
      %677 = vadd.xlane.f32.xlu0 %v676
      %v678 = vpop.xlane.xlu0 %677
      %v679 = vmul.f32 %v672, 0.0625
      %v680 = vmul.f32 %v675, 0.0625
      %v681 = vmul.f32 %v678, 0.0625
      %v682 = vmul.f32 %v666, %v666
      %v683 = vmul.f32 %v667, %v667
      %v684 = vmul.f32 %v668, %v668
      %v685 = vsel %vm669, %v682, 0.0
      %686 = vadd.xlane.f32.xlu0 %v685
      %v687 = vpop.xlane.xlu0 %686
      %v688 = vsel %vm669, %v683, 0.0
      %689 = vadd.xlane.f32.xlu0 %v688
      %v690 = vpop.xlane.xlu0 %689
      %v691 = vsel %vm669, %v684, 0.0
      %692 = vadd.xlane.f32.xlu0 %v691
      %v693 = vpop.xlane.xlu0 %692
      %v694 = vmul.f32 %v687, 0.0625
      %v695 = vmul.f32 %v690, 0.0625
      %v696 = vmul.f32 %v693, 0.0625
      %v697 = vmul.f32 %v679, %v679
      %v698 = vmul.f32 %v680, %v680
      %v699 = vmul.f32 %v681, %v681
      %v700 = vsub.f32 %v694, %v697
      %v701 = vsub.f32 %v695, %v698
      %v702 = vsub.f32 %v696, %v699
      %v703 = vmax.f32 %v700, 0.0
      %v704 = vmax.f32 %v701, 0.0
      %v705 = vmax.f32 %v702, 0.0
      %v706 = vsub.f32 %v666, %v679
      %v707 = vsub.f32 %v667, %v680
      %v708 = vsub.f32 %v668, %v681
      %v709 = vadd.f32 %v703, 1e-05
      %v710 = vadd.f32 %v704, 1e-05
      %v711 = vadd.f32 %v705, 1e-05
      %v712 = vrsqrt.pop %v709
      %v713 = vrsqrt.pop %v710
      %v714 = vrsqrt.pop %v711
      %v715 = vmul.f32 %v706, %v712
      %v716 = vmul.f32 %v707, %v713
      %v717 = vmul.f32 %v708, %v714
      %v718 = vld [vmem:[%s3] sm:$0x1]
      %v720 = vlaneseq
      %v721 = vshrl.u32 %v720, 7
      %v722 = vsub.s32 0, %v721
      %v723 = vrot.slane %v718, %v722
      %v725 = vmul.f32 %v715, %v723
      %v726 = vmul.f32 %v716, %v723
      %v727 = vmul.f32 %v717, %v723
      %v728 = vld [vmem:[%s4] sm:$0x1]
      %v730 = vlaneseq
      %v731 = vshrl.u32 %v730, 7
      %v732 = vsub.s32 0, %v731
      %v733 = vrot.slane %v728, %v732
      %v735 = vadd.f32 %v725, %v733
      %v736 = vadd.f32 %v726, %v733
      %v737 = vadd.f32 %v727, %v733
      %v738 = vmul.f32 %v735, 0.5
      %v739 = vmul.f32 %v736, 0.5
      %v740 = vmul.f32 %v737, 0.5
      %v741 = vmul.f32 %v735, 0.044715
      %v742 = vmul.f32 %v736, 0.044715
      %v743 = vmul.f32 %v737, 0.044715
      %v744 = vmul.f32 %v741, %v735
      %v745 = vmul.f32 %v742, %v736
      %v746 = vmul.f32 %v743, %v737
      %v747 = vmul.f32 %v744, %v735
      %v748 = vmul.f32 %v745, %v736
      %v749 = vmul.f32 %v746, %v737
      %v750 = vadd.f32 %v735, %v747
      %v751 = vadd.f32 %v736, %v748
      %v752 = vadd.f32 %v737, %v749
      %v753 = vmul.f32 %v750, 0.7978846
      %v754 = vmul.f32 %v751, 0.7978846
      %v755 = vmul.f32 %v752, 0.7978846
      %v756 = vtanh.pop %v753
      %v757 = vtanh.pop %v754
      %v758 = vtanh.pop %v755
      %v759 = vadd.f32 %v756, 1.0
      %v760 = vadd.f32 %v757, 1.0
      %v761 = vadd.f32 %v758, 1.0
      %v762 = vmul.f32 %v738, %v759
      %v763 = vmul.f32 %v739, %v760
      %v764 = vmul.f32 %v740, %v761
      %765 = vst.msk [vmem:[%s224] sm:$0xff] %vm669, %v762
      %766 = vst.msk [vmem:[%s224 + $0x8] sm:$0xff] %vm669, %v763
      %767 = vst.msk [vmem:[%s224 + $0x10] sm:$0xff] %vm669, %v764
      %s768 = smul.u32 3, %s16
      %p769 = scmp.lt.s32.totalorder %s768, 11
      %s770 = scalar_select %p769, %s768, 11
      %s771 = smul.addr %s770, 8
      %s772 = scalar_lea.vmem %s5, %s771
      // Predicated region
      $region41: #{input_conv1d_forward.1} parent=39 // pred_check
        %p773 = pneg %p144
      $region42: #{input_conv1d_forward.1} parent=39 // pred_check_branch
        %775 = sbr.rel (%p773) target = $region44
      $region43: #{input_conv1d_forward.1} parent=39 // pred_region
        %s776 = smul.u32 3, %s16
      $region44: #{input_conv1d_forward.1} parent=39 // pred_fallthru
        _
    $region40: #{input_conv1d_forward.1} parent=5 // pred_fallthru
      _
    %p777 = scmp.le.s32.totalorder 2, %s11
    // Predicated region
    $region45: #{input_conv1d_forward.1} parent=5 // pred_check
      %p778 = pneg %p777
    $region46: #{input_conv1d_forward.1} parent=5 // pred_check_branch
      %780 = sbr.rel (%p778) target = $region48
    $region47: #{input_conv1d_forward.1} parent=5 // pred_region
      %s781 = ssub.s32 %s11, 2
      // Predicated region
      $region49: #{input_conv1d_forward.1} parent=47 // pred_check
        %p782 = pneg %p150
      $region50: #{input_conv1d_forward.1} parent=47 // pred_check_branch
        %784 = sbr.rel (%p782) target = $region52
      $region51: #{input_conv1d_forward.1} parent=47 // pred_region
        %s785 = smul.u32 3, %s17
        %p786 = scmp.lt.s32.totalorder %s785, 11
        %s787 = scalar_select %p786, %s785, 11
        %s788 = smul.addr %s787, 8
        %s789 = scalar_lea.vmem %s5, %s788
      $region52: #{input_conv1d_forward.1} parent=47 // pred_fallthru
        _
    $region48: #{input_conv1d_forward.1} parent=5 // pred_fallthru
      _
  $region6: #{input_conv1d_forward.1} parent=0 // loop_footer
    %s15 = sadd.s32 1, %s11
  $region7: #{input_conv1d_forward.1} parent=0 // loop_footer_branch
    %10 = sbr.rel target = $region3
  $region8: #{input_conv1d_forward.1} parent=0 // loop_exit
    _

</llo_original>
